<compile_context>
chip_gen: v7x
topology: tpu7x:2x2x1
jax: 0.10.0
libtpu: 0.0.40
codegen_flags: <defaults>
</compile_context>

<pallas_src>
import functools

import jax
import jax.numpy as jnp
from jax.experimental import pallas as pl
from jax.experimental.pallas import tpu as pltpu


def _round_up(x, m):
    return (x + m - 1) // m * m


def _make_kernel(tB, tL, CK_pad, C_out, L_out):
    def kernel(p_ref, w_ref, shift_ref, out_ref):
        l = pl.program_id(1)

        p = p_ref[...]                                   # (tB, tL, CK_pad) bf16
        w = w_ref[...]                                   # (CK_pad, C_out)  bf16

        # Conv1d (stride 1) as one dense MXU matmul: M = tB*tL, K = 128, N = 256.
        y = jnp.dot(p.reshape(tB * tL, CK_pad), w,
                    preferred_element_type=jnp.float32)  # (tB*tL, C_out) f32
        y = y.reshape(tB, tL, C_out)

        # Mask rows beyond the true conv output length (L_out padding) to -inf
        # so they never win the max.
        row = l * tL + jax.lax.broadcasted_iota(jnp.int32, (1, tL, 1), 1)
        y = jnp.where(row < L_out, y, -jnp.inf)

        tile_max = jnp.max(y, axis=1)                    # (tB, C_out) raw conv max

        # Running-max accumulator lives in out_ref (same output block across
        # the "arbitrary" L axis). Initialized to -inf for robustness.
        @pl.when(l == 0)
        def _():
            out_ref[...] = jnp.full_like(out_ref, -jnp.inf)

        out_ref[...] = jnp.maximum(out_ref[...], tile_max)

        # Epilogue applied once after the full reduction: BN shift (scale is
        # already folded into the weights) + ReLU. Valid because +shift and
        # ReLU are monotone, so they commute with the max-pool.
        @pl.when(l == pl.num_programs(1) - 1)
        def _():
            out_ref[...] = jnp.maximum(out_ref[...] + shift_ref[...], 0.0)

    return kernel


def cnn_net_forward(x, conv_w, conv_b, bn_gamma, bn_beta, bn_mean, bn_var,
                    kernel_size, eps=1e-5, block_b=8, block_l=128):
    """x: (B, C_in, max_len) float32 (NCL, same as PyTorch Conv1d input).

    Returns (B, 256) float32, matching Cnn_net.forward in eval mode.
    """
    B, C_in, L = x.shape
    k = kernel_size
    L_out = L - k + 1
    C_out = conv_w.shape[0]
    CK = C_in * k
    CK_pad = _round_up(CK, 128)

    # --- glue: im2col via k shifted slices -> (B, L_out, C_in*k) ---
    cols = [x[:, :, j:j + L_out] for j in range(k)]      # k x (B, C_in, L_out)
    patches = jnp.stack(cols, axis=-1)                   # (B, C_in, L_out, k)
    patches = jnp.transpose(patches, (0, 2, 1, 3)).reshape(B, L_out, CK)

    # --- glue: fold conv bias + BatchNorm (eval) into the weights / a shift ---
    scale = bn_gamma / jnp.sqrt(bn_var + eps)            # (C_out,)
    shift = (conv_b - bn_mean) * scale + bn_beta         # (C_out,)
    w_mat = jnp.transpose(conv_w, (1, 2, 0)).reshape(CK, C_out) * scale[None, :]

    # --- tiling: pad K to 128, pad B / L_out to tile multiples, cast bf16 ---
    tB = min(_round_up(block_b, 8), B)
    tL = min(_round_up(block_l, 8), _round_up(L_out, 8))
    B_pad = _round_up(B, tB)
    L_pad = _round_up(L_out, tL)

    patches = jnp.pad(
        patches, ((0, B_pad - B), (0, L_pad - L_out), (0, CK_pad - CK)))
    w_mat = jnp.pad(w_mat, ((0, CK_pad - CK), (0, 0)))
    patches = patches.astype(jnp.bfloat16)
    w_mat = w_mat.astype(jnp.bfloat16)
    shift = shift.reshape(1, C_out).astype(jnp.float32)

    grid = (B_pad // tB, L_pad // tL)
    kernel = _make_kernel(tB, tL, CK_pad, C_out, L_out)

    out = pl.pallas_call(
        kernel,
        out_shape=jax.ShapeDtypeStruct((B_pad, C_out), jnp.float32),
        grid=grid,
        in_specs=[
            pl.BlockSpec((tB, tL, CK_pad), lambda b, l: (b, l, 0)),
            pl.BlockSpec((CK_pad, C_out), lambda b, l: (0, 0)),
            pl.BlockSpec((1, C_out), lambda b, l: (0, 0)),
        ],
        out_specs=pl.BlockSpec((tB, C_out), lambda b, l: (b, 0)),
        compiler_params=pltpu.CompilerParams(
            dimension_semantics=("parallel", "arbitrary"),
            vmem_limit_bytes=64 * 1024 * 1024),
    )(patches, w_mat, shift)

    return out[:B]


def _reference_forward(x, conv_w, conv_b, bn_gamma, bn_beta, bn_mean, bn_var,
                       kernel_size, eps=1e-5):
    """Plain-JAX f32 reference matching PyTorch eval-mode forward."""
    y = jax.lax.conv_general_dilated(
        x, conv_w, window_strides=(1,), padding="VALID",
        dimension_numbers=("NCH", "OIH", "NCH"))
    y = y + conv_b[None, :, None]
    y = (y - bn_mean[None, :, None]) / jnp.sqrt(bn_var[None, :, None] + eps)
    y = y * bn_gamma[None, :, None] + bn_beta[None, :, None]
    y = jnp.maximum(y, 0.0)
    return jnp.max(y, axis=2)   # MaxPool1d over full conv length + Flatten


if __name__ == "__main__":
    # Small but module-consistent shapes. block_b/block_l chosen so the test
    # exercises multiple "parallel" batch tiles and multiple "arbitrary" L
    # tiles, including a masked partial last L tile (L_out = 30).
    kernel_size = 3
    max_len = 32
    B, C_in, C_out = 16, 26, 256

    key = jax.random.PRNGKey(0)
    kx, kw, kb, kg, kbe, km, kv = jax.random.split(key, 7)

    x = jax.random.normal(kx, (B, C_in, max_len), dtype=jnp.float32)

    # Deterministic synthetic parameters (shapes per nn.Conv1d / nn.BatchNorm1d).
    conv_w = 0.1 * jax.random.normal(kw, (C_out, C_in, kernel_size), jnp.float32)
    conv_b = 0.1 * jax.random.normal(kb, (C_out,), jnp.float32)
    bn_gamma = 1.0 + 0.1 * jax.random.normal(kg, (C_out,), jnp.float32)
    bn_beta = 0.1 * jax.random.normal(kbe, (C_out,), jnp.float32)
    bn_mean = 0.1 * jax.random.normal(km, (C_out,), jnp.float32)
    bn_var = jax.random.uniform(kv, (C_out,), jnp.float32, 0.5, 1.5)

    out = cnn_net_forward(x, conv_w, conv_b, bn_gamma, bn_beta, bn_mean, bn_var,
                          kernel_size, block_b=8, block_l=8)
    out = jax.block_until_ready(out)

    ref = _reference_forward(x, conv_w, conv_b, bn_gamma, bn_beta, bn_mean,
                             bn_var, kernel_size)

    assert out.shape == (B, C_out)
    # bf16 matmul inputs with f32 accumulation -> loosened tolerance vs the
    # pure-f32 reference.
    assert jnp.allclose(out, ref, atol=2e-2, rtol=2e-2), (
        "mismatch vs reference; max abs err = "
        f"{float(jnp.max(jnp.abs(out - ref)))}")
    print("KERNEL_OK")
</pallas_src>

<mosaic_0001>
module attributes {stable_mosaic.version = 11 : i64} {
  func.func @kernel(%arg0: i32, %arg1: i32, %arg2: memref<8x8x128xbf16, #tpu.memory_space<vmem>>, %arg3: memref<128x256xbf16, #tpu.memory_space<vmem>>, %arg4: memref<1x256xf32, #tpu.memory_space<vmem>>, %arg5: memref<8x256xf32, #tpu.memory_space<vmem>>) attributes {dimension_semantics = [#tpu.dimension_semantics<parallel>, #tpu.dimension_semantics<arbitrary>], iteration_bounds = array<i64: 2, 4>, scalar_prefetch = 0 : i64, scratch_operands = 0 : i64, tpu.core_type = #tpu.core_type<tc>, window_params = [{transform_indices = @transform_0, window_bounds = array<i64: 8, 8, 128>}, {pipeline_mode = #tpu.pipeline_mode<synchronous>, transform_indices = @transform_1, window_bounds = array<i64: 128, 256>}, {pipeline_mode = #tpu.pipeline_mode<synchronous>, transform_indices = @transform_2, window_bounds = array<i64: 1, 256>}, {transform_indices = @transform_3, window_bounds = array<i64: 8, 256>}]} {
    %c0 = arith.constant 0 : index
    %c0_0 = arith.constant 0 : index
    %c0_1 = arith.constant 0 : index
    %0 = vector.load %arg2[%c0, %c0_0, %c0_1] : memref<8x8x128xbf16, #tpu.memory_space<vmem>>, vector<8x8x128xbf16>
    %c0_2 = arith.constant 0 : index
    %c0_3 = arith.constant 0 : index
    %1 = vector.load %arg3[%c0_2, %c0_3] : memref<128x256xbf16, #tpu.memory_space<vmem>>, vector<128x256xbf16>
    %2 = vector.shape_cast %0 : vector<8x8x128xbf16> to vector<64x128xbf16>
    %cst = arith.constant dense<0.000000e+00> : vector<64x256xf32>
    %3 = tpu.matmul %2, %1, %cst {dimension_numbers = #tpu.dot_dimension_numbers<[1], [0], [0], [1], [0, 0, 1, 1], [], []>} : vector<64x128xbf16>, vector<128x256xbf16>, vector<64x256xf32> -> vector<64x256xf32>
    %4 = vector.shape_cast %3 : vector<64x256xf32> to vector<8x8x256xf32>
    %c8_i32 = arith.constant 8 : i32
    %5 = arith.muli %arg1, %c8_i32 : i32
    %6 = tpu.iota {dimensions = array<i32: 1>} : vector<1x8x1xi32>
    %7 = vector.broadcast %5 : i32 to vector<1x8x1xi32>
    %8 = arith.addi %7, %6 : vector<1x8x1xi32>
    %c30_i32 = arith.constant 30 : i32
    %9 = vector.broadcast %c30_i32 : i32 to vector<1x8x1xi32>
    %10 = arith.cmpi slt, %8, %9 : vector<1x8x1xi32>
    %cst_4 = arith.constant 0xFF800000 : f32
    %11 = vector.shape_cast %10 : vector<1x8x1xi1> to vector<1x8x1xi1>
    %12 = vector.broadcast %11 : vector<1x8x1xi1> to vector<8x8x256xi1>
    %13 = vector.broadcast %cst_4 : f32 to vector<8x8x256xf32>
    %14 = arith.select %12, %4, %13 : vector<8x8x256xi1>, vector<8x8x256xf32>
    %cst_5 = arith.constant dense<0xFF800000> : vector<8x256xf32>
    %15 = vector.multi_reduction <maximumf>, %14, %cst_5 [1] : vector<8x8x256xf32> to vector<8x256xf32>
    %c0_i32 = arith.constant 0 : i32
    %16 = arith.cmpi eq, %arg1, %c0_i32 : i32
    %17 = arith.extui %16 : i1 to i32
    %c0_i32_6 = arith.constant 0 : i32
    %18 = arith.cmpi ne, %17, %c0_i32_6 : i32
    scf.if %18 {
      %cst_12 = arith.constant 0xFF800000 : f32
      %25 = vector.broadcast %cst_12 : f32 to vector<8x256xf32>
      %c0_13 = arith.constant 0 : index
      %c0_14 = arith.constant 0 : index
      %26 = vector.load %arg5[%c0_13, %c0_14] : memref<8x256xf32, #tpu.memory_space<vmem>>, vector<8x256xf32>
      tpu.vector_store %arg5[%c0_13, %c0_14], %25 {strides = array<i32>} : memref<8x256xf32, #tpu.memory_space<vmem>>, vector<8x256xf32>,
    } else {
    }
    %c0_7 = arith.constant 0 : index
    %c0_8 = arith.constant 0 : index
    %19 = vector.load %arg5[%c0_7, %c0_8] : memref<8x256xf32, #tpu.memory_space<vmem>>, vector<8x256xf32>
    %20 = arith.maximumf %19, %15 : vector<8x256xf32>
    %c0_9 = arith.constant 0 : index
    %c0_10 = arith.constant 0 : index
    %21 = vector.load %arg5[%c0_9, %c0_10] : memref<8x256xf32, #tpu.memory_space<vmem>>, vector<8x256xf32>
    tpu.vector_store %arg5[%c0_9, %c0_10], %20 {strides = array<i32>} : memref<8x256xf32, #tpu.memory_space<vmem>>, vector<8x256xf32>,
    %c3_i32 = arith.constant 3 : i32
    %22 = arith.cmpi eq, %arg1, %c3_i32 : i32
    %23 = arith.extui %22 : i1 to i32
    %c0_i32_11 = arith.constant 0 : i32
    %24 = arith.cmpi ne, %23, %c0_i32_11 : i32
    scf.if %24 {
      %c0_12 = arith.constant 0 : index
      %c0_13 = arith.constant 0 : index
      %25 = vector.load %arg5[%c0_12, %c0_13] : memref<8x256xf32, #tpu.memory_space<vmem>>, vector<8x256xf32>
      %c0_14 = arith.constant 0 : index
      %c0_15 = arith.constant 0 : index
      %26 = vector.load %arg4[%c0_14, %c0_15] : memref<1x256xf32, #tpu.memory_space<vmem>>, vector<1x256xf32>
      %27 = vector.broadcast %26 : vector<1x256xf32> to vector<8x256xf32>
      %28 = arith.addf %25, %27 : vector<8x256xf32>
      %cst_16 = arith.constant 0.000000e+00 : f32
      %29 = vector.broadcast %cst_16 : f32 to vector<8x256xf32>
      %30 = arith.maximumf %28, %29 : vector<8x256xf32>
      %c0_17 = arith.constant 0 : index
      %c0_18 = arith.constant 0 : index
      %31 = vector.load %arg5[%c0_17, %c0_18] : memref<8x256xf32, #tpu.memory_space<vmem>>, vector<8x256xf32>
      tpu.vector_store %arg5[%c0_17, %c0_18], %30 {strides = array<i32>} : memref<8x256xf32, #tpu.memory_space<vmem>>, vector<8x256xf32>,
    } else {
    }
    return
  }
  func.func @transform_0(%arg0: i32, %arg1: i32) -> (i32, i32, i32) {
    %c0_i32 = arith.constant 0 : i32
    %c0_i32_0 = arith.constant 0 : i32
    return %arg0, %arg1, %c0_i32 : i32, i32, i32
  }
  func.func @transform_1(%arg0: i32, %arg1: i32) -> (i32, i32) {
    %c0_i32 = arith.constant 0 : i32
    %c0_i32_0 = arith.constant 0 : i32
    %c0_i32_1 = arith.constant 0 : i32
    return %c0_i32, %c0_i32_0 : i32, i32
  }
  func.func @transform_2(%arg0: i32, %arg1: i32) -> (i32, i32) {
    %c0_i32 = arith.constant 0 : i32
    %c0_i32_0 = arith.constant 0 : i32
    %c0_i32_1 = arith.constant 0 : i32
    return %c0_i32, %c0_i32_0 : i32, i32
  }
  func.func @transform_3(%arg0: i32, %arg1: i32) -> (i32, i32) {
    %c0_i32 = arith.constant 0 : i32
    %c0_i32_0 = arith.constant 0 : i32
    return %arg0, %c0_i32 : i32, i32
  }
}

</mosaic_0001>

<llo_original>
// kernel: tpu_custom_call.1
$region0: #{tpu_custom_call.1}
  #allocation0 [shape = 'u32[]', space=smem, size = 0x4, offset = 0x4, fixed_abs, tag = 'smem constant byte address 0x4 - core index']
  #allocation1 [shape = 'u32[144,128]{1,0:T(1,128)}', space=vmem, size = 0x12000, scoped, tag = 'internal scratch']
  %s0 = inlined_call_operand.hbm [shape: bf16[16,32,128], index: 0, kind: input, shape index: {}]
  %s1 = inlined_call_operand.hbm [shape: bf16[128,256], index: 1, kind: input, shape index: {}]
  %s2 = inlined_call_operand.hbm [shape: f32[1,256], index: 2, kind: input, shape index: {}]
  %s3 = inlined_call_operand.hbm [shape: f32[16,256], index: 3, kind: output, shape index: {}]
  %s4 = sld [smem:[#allocation0]]
  $region65: #{tpu_custom_call.1} parent=0
    _
  %s6 = ssub.s32 1, %s4
  %s7 = scalar_select 0, %s6, %s4
  $region1: #{tpu_custom_call.1} parent=0
    #allocation2 [shape = 'u8[32768]{0}', space=vmem, size = 0x8000, scoped, tag = 'input window, operand 0']
    #allocation3 [shape = 's32[2]{0}', space=sflag, size = 0x8, scoped, tag = 'scoped memory for tpu_custom_call.1']
    #allocation4 [shape = 's32[2]{0}', space=sflag, size = 0x8, scoped, tag = 'scoped memory for tpu_custom_call.1']
    #allocation5 [shape = 'u8[65536]{0}', space=vmem, size = 0x10000, scoped, tag = 'input window, operand 1, single buffered']
    #allocation6 [shape = 's32[1]{0}', space=sflag, size = 0x4, scoped, tag = 'scoped memory for tpu_custom_call.1']
    #allocation7 [shape = 'u8[1024]{0}', space=vmem, size = 0x400, scoped, tag = 'input window, operand 2, single buffered']
    #allocation8 [shape = 'u8[16384]{0}', space=vmem, size = 0x4000, scoped, tag = 'output window, operand 0']
    %8 = vsyncpa [#allocation3], 0
    %s9 = scalar_lea.sflag [#allocation3], 1
    %10 = vsyncpa %s9, 0
    %11 = vsyncpa [#allocation6], 0
    %12 = vsyncpa [#allocation4], 0
    %s13 = scalar_lea.sflag [#allocation4], 1
    %14 = vsyncpa %s13, 0
    loop: start=0, step=1, limit=10
    $region2: #{tpu_custom_call.1} parent=1 // loop_pre_header
      _
    $region3: #{tpu_custom_call.1} parent=1 // loop_header
      %s16 = sphi 0, %s20
      %p17 = scmp.ge.s32.totalorder %s16, 10
      %s23 = sphi 0, %s35
      %s24 = sphi 0, %s31
      %s25 = sphi 0, %s23
      %s26 = sphi 0, %s24
      %s27 = sphi 0, %s25
      %s28 = sphi 0, %s26
      %s40 = sphi 0, %s42
      %s43 = sphi 0, %s40
      %s44 = sphi 0, %s43
      %s60 = sphi 0, %s44
      %s64 = sphi 0, %s64
      %s66 = sphi 0, %s64
      %s67 = sphi 0, %s66
      %s81 = sphi 0, %s67
      %s85 = sphi 0, %s85
      %s87 = sphi 0, %s85
      %s88 = sphi 0, %s87
      %s102 = sphi 0, %s88
      %s108 = sphi 0, %s110
      %s111 = sphi 0, %s108
      %s112 = sphi 0, %s111
      %s128 = sphi 0, %s112
    $region4: #{tpu_custom_call.1} parent=1 // loop_header_branch
      %19 = sbr.rel (%p17) target = $region8
    $region5: #{tpu_custom_call.1} parent=1 // loop_body
      %s21 = ssub.s32 %s16, 1
      %s22 = ssub.s32 %s16, 2
      %s29 = sadd.s32 1, %s24
      %p30 = scmp.ge.s32.totalorder %s29, 4
      %s31 = scalar_select %p30, 0, %s29
      %s32 = sadd.s32 1, %s23
      %s33 = scalar_select %p30, %s32, %s23
      %p34 = scmp.ge.s32.totalorder %s33, 2
      %s35 = scalar_select %p34, 0, %s33
      %s36 = ssub.s32 %s23, %s35
      %s37 = ssub.s32 %s24, %s31
      %s38 = sor.u32 %s36, %s37
      %p39 = scmp.eq.s32.totalorder %s38, 0
      %s41 = sadd.s32 %s40, 1
      %s42 = scalar_select %p39, %s40, %s41
      %p45 = pneg %p39
      %p46 = scmp.eq.s32.totalorder %s16, 7
      %p47 = por %p45, %p46
      %p48 = scmp.ne.s32.totalorder %s40, %s43
      %p49 = scmp.eq.s32.totalorder %s16, 0
      %p50 = por %p48, %p49
      %p51 = scmp.ne.s32.totalorder %s40, %s43
      %p52 = scmp.eq.s32.totalorder %s21, 7
      %p53 = por %p51, %p52
      %p54 = scmp.ne.s32.totalorder %s43, %s44
      %p55 = scmp.eq.s32.totalorder %s21, 0
      %p56 = por %p54, %p55
      %p57 = scmp.ne.s32.totalorder %s43, %s44
      %p58 = scmp.eq.s32.totalorder %s22, 7
      %p59 = por %p57, %p58
      %p61 = scmp.ne.s32.totalorder %s44, %s60
      %p62 = scmp.eq.s32.totalorder %s22, 0
      %p63 = por %p61, %p62
      %s65 = sadd.s32 %s64, 1
      %p68 = scmp.eq.s32.totalorder %s16, 7
      %p69 = scmp.ne.s32.totalorder %s64, %s66
      %p70 = scmp.eq.s32.totalorder %s16, 0
      %p71 = por %p69, %p70
      %p72 = scmp.ne.s32.totalorder %s64, %s66
      %p73 = scmp.eq.s32.totalorder %s21, 7
      %p74 = por %p72, %p73
      %p75 = scmp.ne.s32.totalorder %s66, %s67
      %p76 = scmp.eq.s32.totalorder %s21, 0
      %p77 = por %p75, %p76
      %p78 = scmp.ne.s32.totalorder %s66, %s67
      %p79 = scmp.eq.s32.totalorder %s22, 7
      %p80 = por %p78, %p79
      %p82 = scmp.ne.s32.totalorder %s67, %s81
      %p83 = scmp.eq.s32.totalorder %s22, 0
      %p84 = por %p82, %p83
      %s86 = sadd.s32 %s85, 1
      %p89 = scmp.eq.s32.totalorder %s16, 7
      %p90 = scmp.ne.s32.totalorder %s85, %s87
      %p91 = scmp.eq.s32.totalorder %s16, 0
      %p92 = por %p90, %p91
      %p93 = scmp.ne.s32.totalorder %s85, %s87
      %p94 = scmp.eq.s32.totalorder %s21, 7
      %p95 = por %p93, %p94
      %p96 = scmp.ne.s32.totalorder %s87, %s88
      %p97 = scmp.eq.s32.totalorder %s21, 0
      %p98 = por %p96, %p97
      %p99 = scmp.ne.s32.totalorder %s87, %s88
      %p100 = scmp.eq.s32.totalorder %s22, 7
      %p101 = por %p99, %p100
      %p103 = scmp.ne.s32.totalorder %s88, %s102
      %p104 = scmp.eq.s32.totalorder %s22, 0
      %p105 = por %p103, %p104
      %s106 = ssub.s32 %s23, %s35
      %p107 = scmp.eq.s32.totalorder %s106, 0
      %s109 = sadd.s32 %s108, 1
      %s110 = scalar_select %p107, %s108, %s109
      %p113 = pneg %p107
      %p114 = scmp.eq.s32.totalorder %s16, 7
      %p115 = por %p113, %p114
      %p116 = scmp.ne.s32.totalorder %s108, %s111
      %p117 = scmp.eq.s32.totalorder %s16, 0
      %p118 = por %p116, %p117
      %p119 = scmp.ne.s32.totalorder %s108, %s111
      %p120 = scmp.eq.s32.totalorder %s21, 7
      %p121 = por %p119, %p120
      %p122 = scmp.ne.s32.totalorder %s111, %s112
      %p123 = scmp.eq.s32.totalorder %s21, 0
      %p124 = por %p122, %p123
      %p125 = scmp.ne.s32.totalorder %s111, %s112
      %p126 = scmp.eq.s32.totalorder %s22, 7
      %p127 = por %p125, %p126
      %p129 = scmp.ne.s32.totalorder %s112, %s128
      %p130 = scmp.eq.s32.totalorder %s22, 0
      %p131 = por %p129, %p130
      %p132 = scmp.le.s32.totalorder 1, %s16
      %p133 = scmp.lt.s32.totalorder %s16, 9
      %p134 = pnand %p132, %p133
      %p135 = pneg %p134
      // Predicated region
      $region9: #{tpu_custom_call.1} parent=5 // pred_check
        _
      $region10: #{tpu_custom_call.1} parent=5 // pred_check_branch
        %137 = sbr.rel (%p134) target = $region12
      $region11: #{tpu_custom_call.1} parent=5 // pred_region
        %s138 = ssub.s32 %s16, 1
        // Predicated region
        $region13: #{tpu_custom_call.1} parent=11 // pred_check
          %p139 = pneg %p77
        $region14: #{tpu_custom_call.1} parent=11 // pred_check_branch
          %141 = sbr.rel (%p139) target = $region16
        $region15: #{tpu_custom_call.1} parent=11 // pred_region
          %s143 = ssub.s32 2048, 2048
          %144 = vsyncadd [#allocation6], %s143
          %s145 = sshll.u32 [#allocation5], 4
          %s146 = int_to_ptr.vmem [resolvable:$true] %s145
          %151 = dma.hbm_to_vmem [thread:$0]  %s1, 2048, %s146, [#allocation6], 128, 128, 8
        $region16: #{tpu_custom_call.1} parent=11 // pred_fallthru
          _
        // Predicated region
        $region17: #{tpu_custom_call.1} parent=11 // pred_check
          %p152 = pneg %p98
        $region18: #{tpu_custom_call.1} parent=11 // pred_check_branch
          %154 = sbr.rel (%p152) target = $region20
        $region19: #{tpu_custom_call.1} parent=11 // pred_region
          %s156 = ssub.s32 32, 32
          %157 = vsyncadd [#allocation6], %s156
          %s159 = sshll.u32 [#allocation7], 4
          %s160 = int_to_ptr.vmem [resolvable:$true] %s159
          %162 = dma.hbm_to_vmem [thread:$0]  %s2, 32, %s160, [#allocation6]
        $region20: #{tpu_custom_call.1} parent=11 // pred_fallthru
          _
      $region12: #{tpu_custom_call.1} parent=5 // pred_fallthru
        _
      %p163 = scmp.lt.s32.totalorder %s16, 8
      // Predicated region
      $region21: #{tpu_custom_call.1} parent=5 // pred_check
        %p164 = pneg %p163
      $region22: #{tpu_custom_call.1} parent=5 // pred_check_branch
        %166 = sbr.rel (%p164) target = $region24
      $region23: #{tpu_custom_call.1} parent=5 // pred_region
        // Predicated region
        $region25: #{tpu_custom_call.1} parent=23 // pred_check
          %p167 = pneg %p50
        $region26: #{tpu_custom_call.1} parent=23 // pred_check_branch
          %169 = sbr.rel (%p167) target = $region28
        $region27: #{tpu_custom_call.1} parent=23 // pred_region
          %s170 = sand.u32 %s40, 1
          %s171 = scalar_lea.sflag [#allocation3], %s170
          %s172 = sand.u32 %s40, 1
          %s173 = smul.addr %s172, 32
          %s174 = scalar_lea.vmem [#allocation2], %s173
          %s175 = smul.u32 8, %s23
          %s177 = ssub.s32 512, 512
          %178 = vsyncadd %s171, %s177
          %s179 = smul.addr %s175, 4
          %s180 = sadd.s32 %s24, %s179
          %s181 = smul.addr %s180, 64
          %s182 = scalar_lea.hbm %s0, %s181
          %s183 = sshll.u32 %s174, 4
          %s184 = int_to_ptr.vmem [resolvable:$true] %s183
          %189 = dma.hbm_to_vmem [thread:$0]  %s182, 512, %s184, %s171, 256, 64, 4
        $region28: #{tpu_custom_call.1} parent=23 // pred_fallthru
          _
      $region24: #{tpu_custom_call.1} parent=5 // pred_fallthru
        _
      %p190 = scmp.le.s32.totalorder 1, %s16
      %p191 = scmp.lt.s32.totalorder %s16, 9
      %p192 = pnand %p190, %p191
      %p193 = pneg %p192
      // Predicated region
      $region29: #{tpu_custom_call.1} parent=5 // pred_check
        _
      $region30: #{tpu_custom_call.1} parent=5 // pred_check_branch
        %195 = sbr.rel (%p192) target = $region32
      $region31: #{tpu_custom_call.1} parent=5 // pred_region
        %s196 = ssub.s32 %s16, 1
        %s197 = sand.u32 %s43, 1
        %s198 = scalar_lea.sflag [#allocation3], %s197
        %s199 = sand.u32 %s43, 1
        %s200 = smul.addr %s199, 32
        %s201 = scalar_lea.vmem [#allocation2], %s200
        // Predicated region
        $region33: #{tpu_custom_call.1} parent=31 // pred_check
          %p202 = pneg %p56
        $region34: #{tpu_custom_call.1} parent=31 // pred_check_branch
          %204 = sbr.rel (%p202) target = $region36
        $region35: #{tpu_custom_call.1} parent=31 // pred_region
          %205 = dma.done %s198, 512
        $region36: #{tpu_custom_call.1} parent=31 // pred_fallthru
          _
        // Predicated region
        $region37: #{tpu_custom_call.1} parent=31 // pred_check
          %p206 = pneg %p77
        $region38: #{tpu_custom_call.1} parent=31 // pred_check_branch
          %208 = sbr.rel (%p206) target = $region40
        $region39: #{tpu_custom_call.1} parent=31 // pred_region
          %209 = dma.done [#allocation6], 2048
        $region40: #{tpu_custom_call.1} parent=31 // pred_fallthru
          _
        // Predicated region
        $region41: #{tpu_custom_call.1} parent=31 // pred_check
          %p210 = pneg %p98
        $region42: #{tpu_custom_call.1} parent=31 // pred_check_branch
          %212 = sbr.rel (%p210) target = $region44
        $region43: #{tpu_custom_call.1} parent=31 // pred_region
          %213 = dma.done [#allocation6], 32
        $region44: #{tpu_custom_call.1} parent=31 // pred_fallthru
          _
        %s214 = sand.u32 %s43, 1
        %s215 = scalar_lea.sflag [#allocation3], %s214
        %s216 = sand.u32 %s43, 1
        %s217 = smul.addr %s216, 32
        %s218 = scalar_lea.vmem [#allocation2], %s217
        %p219 = pneg %p56
        %p220 = pneg %p53
        %p221 = pneg %p77
        %p222 = pneg %p74
        %p223 = pneg %p98
        %p224 = pneg %p95
        %p225 = pneg %p124
        %p226 = pneg %p121
        %s227 = sand.u32 %s111, 1
        %s228 = scalar_lea.sflag [#allocation4], %s227
        %s229 = sand.u32 %s111, 1
        %s230 = smul.addr %s229, 16
        %s231 = scalar_lea.vmem [#allocation8], %s230
        %s232 = smul.u32 8, %s25
        %v234 = vld [vmem:[%s201] sm:$0xf]
        %v235 = vld [vmem:[%s201 + $0x4] sm:$0xf]
        %v236 = vld [vmem:[%s201 + $0x8] sm:$0xf]
        %v237 = vld [vmem:[%s201 + $0xc] sm:$0xf]
        %v238 = vld [vmem:[%s201 + $0x10] sm:$0xf]
        %v239 = vld [vmem:[%s201 + $0x14] sm:$0xf]
        %v240 = vld [vmem:[%s201 + $0x18] sm:$0xf]
        %v241 = vld [vmem:[%s201 + $0x1c] sm:$0xf]
        %v242 = vld [vmem:[#allocation5] sm:$0xff]
        %v243 = vld [vmem:[#allocation5 + $0x8] sm:$0xff]
        %v244 = vld [vmem:[#allocation5 + $0x10] sm:$0xff]
        %v245 = vld [vmem:[#allocation5 + $0x18] sm:$0xff]
        %v246 = vld [vmem:[#allocation5 + $0x20] sm:$0xff]
        %v247 = vld [vmem:[#allocation5 + $0x28] sm:$0xff]
        %v248 = vld [vmem:[#allocation5 + $0x30] sm:$0xff]
        %v249 = vld [vmem:[#allocation5 + $0x38] sm:$0xff]
        %v250 = vld [vmem:[#allocation5 + $0x40] sm:$0xff]
        %v251 = vld [vmem:[#allocation5 + $0x48] sm:$0xff]
        %v252 = vld [vmem:[#allocation5 + $0x50] sm:$0xff]
        %v253 = vld [vmem:[#allocation5 + $0x58] sm:$0xff]
        %v254 = vld [vmem:[#allocation5 + $0x60] sm:$0xff]
        %v255 = vld [vmem:[#allocation5 + $0x68] sm:$0xff]
        %v256 = vld [vmem:[#allocation5 + $0x70] sm:$0xff]
        %v257 = vld [vmem:[#allocation5 + $0x78] sm:$0xff]
        %v266 = vunpack.c.l.b16 %v234
        %v267 = vunpack.c.l.b16 %v235
        %v268 = vunpack.c.l.b16 %v236
        %v269 = vunpack.c.l.b16 %v237
        %v270 = vunpack.c.l.b16 %v238
        %v271 = vunpack.c.l.b16 %v239
        %v272 = vunpack.c.l.b16 %v240
        %v273 = vunpack.c.l.b16 %v241
        %v274 = vpack.c.b16 %v267, %v266
        %v275 = vpack.c.b16 %v269, %v268
        %v276 = vpack.c.b16 %v271, %v270
        %v277 = vpack.c.b16 %v273, %v272
        %v298 = vunpack.c.l.b16 %v242
        %v299 = vunpack.c.h.b16 %v242
        %v300 = vunpack.c.l.b16 %v243
        %v301 = vunpack.c.h.b16 %v243
        %v302 = vunpack.c.l.b16 %v244
        %v303 = vunpack.c.h.b16 %v244
        %v304 = vunpack.c.l.b16 %v245
        %v305 = vunpack.c.h.b16 %v245
        %v306 = vunpack.c.l.b16 %v246
        %v307 = vunpack.c.h.b16 %v246
        %v308 = vunpack.c.l.b16 %v247
        %v309 = vunpack.c.h.b16 %v247
        %v310 = vunpack.c.l.b16 %v248
        %v311 = vunpack.c.h.b16 %v248
        %v312 = vunpack.c.l.b16 %v249
        %v313 = vunpack.c.h.b16 %v249
        %v314 = vunpack.c.l.b16 %v250
        %v315 = vunpack.c.h.b16 %v250
        %v316 = vunpack.c.l.b16 %v251
        %v317 = vunpack.c.h.b16 %v251
        %v318 = vunpack.c.l.b16 %v252
        %v319 = vunpack.c.h.b16 %v252
        %v320 = vunpack.c.l.b16 %v253
        %v321 = vunpack.c.h.b16 %v253
        %v322 = vunpack.c.l.b16 %v254
        %v323 = vunpack.c.h.b16 %v254
        %v324 = vunpack.c.l.b16 %v255
        %v325 = vunpack.c.h.b16 %v255
        %v326 = vunpack.c.l.b16 %v256
        %v327 = vunpack.c.h.b16 %v256
        %v328 = vunpack.c.l.b16 %v257
        %v329 = vunpack.c.h.b16 %v257
        %v330 = vpack.c.b16 %v300, %v298
        %v331 = vpack.c.b16 %v301, %v299
        %v332 = vpack.c.b16 %v304, %v302
        %v333 = vpack.c.b16 %v305, %v303
        %v334 = vpack.c.b16 %v308, %v306
        %v335 = vpack.c.b16 %v309, %v307
        %v336 = vpack.c.b16 %v312, %v310
        %v337 = vpack.c.b16 %v313, %v311
        %v338 = vpack.c.b16 %v316, %v314
        %v339 = vpack.c.b16 %v317, %v315
        %v340 = vpack.c.b16 %v320, %v318
        %v341 = vpack.c.b16 %v321, %v319
        %v342 = vpack.c.b16 %v324, %v322
        %v343 = vpack.c.b16 %v325, %v323
        %v344 = vpack.c.b16 %v328, %v326
        %v345 = vpack.c.b16 %v329, %v327
        %362 = vmatprep.subr.bf16.mxu0 %v331
        %363 = vmatpush1.bf16.msra.mxu0 %v330
        %364 = vmatprep.subr.bf16.mxu0 %v333
        %365 = vmatpush1.bf16.msra.mxu0 %v332
        %366 = vmatprep.subr.bf16.mxu0 %v335
        %367 = vmatpush1.bf16.msra.mxu0 %v334
        %368 = vmatprep.subr.bf16.mxu0 %v337
        %369 = vmatpush1.bf16.msra.mxu0 %v336
        %370 = vmatprep.subr.bf16.mxu0 %v339
        %371 = vmatpush1.bf16.msra.mxu0 %v338
        %372 = vmatprep.subr.bf16.mxu0 %v341
        %373 = vmatpush1.bf16.msra.mxu0 %v340
        %374 = vmatprep.subr.bf16.mxu0 %v343
        %375 = vmatpush1.bf16.msra.mxu0 %v342
        %376 = vmatprep.subr.bf16.mxu0 %v345
        %377 = vmatpush1.bf16.msra.mxu0 %v344
        %378 = vmatprep.subr.bf16.mxu0 0
        %379 = vmatpush1.bf16.msra.mxu0 0
        %380 = vmatprep.subr.bf16.mxu0 0
        %381 = vmatpush1.bf16.msra.mxu0 0
        %382 = vmatprep.subr.bf16.mxu0 0
        %383 = vmatpush1.bf16.msra.mxu0 0
        %384 = vmatprep.subr.bf16.mxu0 0
        %385 = vmatpush1.bf16.msra.mxu0 0
        %386 = vmatprep.subr.bf16.mxu0 0
        %387 = vmatpush1.bf16.msra.mxu0 0
        %388 = vmatprep.subr.bf16.mxu0 0
        %389 = vmatpush1.bf16.msra.mxu0 0
        %390 = vmatprep.subr.bf16.mxu0 0
        %391 = vmatpush1.bf16.msra.mxu0 0
        %392 = vmatprep.subr.bf16.mxu0 0
        %393 = vmatpush1.bf16.msra.mxu0 0
        %394 = vmatprep.mubr.bf16.mxu0 0
        %395 = vmatmul.mubr.bf16.gmra.mrb[0].mxu0 %v274
        %v396 = vpop.f32.mrb[0].mxu0
        %v397 = vadd.f32 0.0, %v396
        %v398 = vpop.f32.mrb[0].mxu0
        %v399 = vadd.f32 0.0, %v398
        %v400 = vpop.f32.mrb[0].mxu0
        %v401 = vadd.f32 0.0, %v400
        %v402 = vpop.f32.mrb[0].mxu0
        %v403 = vadd.f32 0.0, %v402
        %404 = vmatprep.mubr.bf16.mxu0 0
        %405 = vmatmul.mubr.bf16.gmra.mrb[0].mxu0 %v275
        %v406 = vpop.f32.mrb[0].mxu0
        %v407 = vadd.f32 0.0, %v406
        %v408 = vpop.f32.mrb[0].mxu0
        %v409 = vadd.f32 0.0, %v408
        %v410 = vpop.f32.mrb[0].mxu0
        %v411 = vadd.f32 0.0, %v410
        %v412 = vpop.f32.mrb[0].mxu0
        %v413 = vadd.f32 0.0, %v412
        %414 = vmatprep.mubr.bf16.mxu0 0
        %415 = vmatmul.mubr.bf16.gmra.mrb[0].mxu0 %v276
        %v416 = vpop.f32.mrb[0].mxu0
        %v417 = vadd.f32 0.0, %v416
        %v418 = vpop.f32.mrb[0].mxu0
        %v419 = vadd.f32 0.0, %v418
        %v420 = vpop.f32.mrb[0].mxu0
        %v421 = vadd.f32 0.0, %v420
        %v422 = vpop.f32.mrb[0].mxu0
        %v423 = vadd.f32 0.0, %v422
        %424 = vmatprep.mubr.bf16.mxu0 0
        %425 = vmatmul.mubr.bf16.gmra.mrb[0].mxu0 %v277
        %v426 = vpop.f32.mrb[0].mxu0
        %v427 = vadd.f32 0.0, %v426
        %v428 = vpop.f32.mrb[0].mxu0
        %v429 = vadd.f32 0.0, %v428
        %v430 = vpop.f32.mrb[0].mxu0
        %v431 = vadd.f32 0.0, %v430
        %v432 = vpop.f32.mrb[0].mxu0
        %v433 = vadd.f32 0.0, %v432
        %434 = vdwg.mxu0
        %s435 = smul.u32 %s26, 8
        %v436 = vlaneseq
        %v437 = vshrl.u32 %v436, 7
        %v438 = vstv %s435
        %v439 = vadd.s32 %v438, %v437
        %vm440 = vcmp.lt.s32.totalorder %v439, 30
        %v441 = vsel %vm440, 1, 0
        %vm442 = vcmp.eq.s32.totalorder %v441, 1
        %v443 = vsel %vm442, %v397, -inf
        %v444 = vsel %vm442, %v399, -inf
        %v445 = vsel %vm442, %v401, -inf
        %v446 = vsel %vm442, %v403, -inf
        %v447 = vsel %vm442, %v407, -inf
        %v448 = vsel %vm442, %v409, -inf
        %v449 = vsel %vm442, %v411, -inf
        %v450 = vsel %vm442, %v413, -inf
        %v451 = vsel %vm442, %v417, -inf
        %v452 = vsel %vm442, %v419, -inf
        %v453 = vsel %vm442, %v421, -inf
        %v454 = vsel %vm442, %v423, -inf
        %v455 = vsel %vm442, %v427, -inf
        %v456 = vsel %vm442, %v429, -inf
        %v457 = vsel %vm442, %v431, -inf
        %v458 = vsel %vm442, %v433, -inf
        %v459 = vrot.slane %v443, 4
        %v460 = vmax.f32 %v443, %v459
        %v461 = vrot.slane %v460, 2
        %v462 = vmax.f32 %v460, %v461
        %v463 = vrot.slane %v462, 1
        %v464 = vmax.f32 %v462, %v463
        %v465 = vrot.slane %v444, 4
        %v466 = vmax.f32 %v444, %v465
        %v467 = vrot.slane %v466, 2
        %v468 = vmax.f32 %v466, %v467
        %v469 = vrot.slane %v468, 1
        %v470 = vmax.f32 %v468, %v469
        %v471 = vrot.slane %v445, 4
        %v472 = vmax.f32 %v445, %v471
        %v473 = vrot.slane %v472, 2
        %v474 = vmax.f32 %v472, %v473
        %v475 = vrot.slane %v474, 1
        %v476 = vmax.f32 %v474, %v475
        %v477 = vrot.slane %v446, 4
        %v478 = vmax.f32 %v446, %v477
        %v479 = vrot.slane %v478, 2
        %v480 = vmax.f32 %v478, %v479
        %v481 = vrot.slane %v480, 1
        %v482 = vmax.f32 %v480, %v481
        %v483 = vrot.slane %v447, 4
        %v484 = vmax.f32 %v447, %v483
        %v485 = vrot.slane %v484, 2
        %v486 = vmax.f32 %v484, %v485
        %v487 = vrot.slane %v486, 1
        %v488 = vmax.f32 %v486, %v487
        %v489 = vrot.slane %v448, 4
        %v490 = vmax.f32 %v448, %v489
        %v491 = vrot.slane %v490, 2
        %v492 = vmax.f32 %v490, %v491
        %v493 = vrot.slane %v492, 1
        %v494 = vmax.f32 %v492, %v493
        %v495 = vrot.slane %v449, 4
        %v496 = vmax.f32 %v449, %v495
        %v497 = vrot.slane %v496, 2
        %v498 = vmax.f32 %v496, %v497
        %v499 = vrot.slane %v498, 1
        %v500 = vmax.f32 %v498, %v499
        %v501 = vrot.slane %v450, 4
        %v502 = vmax.f32 %v450, %v501
        %v503 = vrot.slane %v502, 2
        %v504 = vmax.f32 %v502, %v503
        %v505 = vrot.slane %v504, 1
        %v506 = vmax.f32 %v504, %v505
        %v507 = vrot.slane %v451, 4
        %v508 = vmax.f32 %v451, %v507
        %v509 = vrot.slane %v508, 2
        %v510 = vmax.f32 %v508, %v509
        %v511 = vrot.slane %v510, 1
        %v512 = vmax.f32 %v510, %v511
        %v513 = vrot.slane %v452, 4
        %v514 = vmax.f32 %v452, %v513
        %v515 = vrot.slane %v514, 2
        %v516 = vmax.f32 %v514, %v515
        %v517 = vrot.slane %v516, 1
        %v518 = vmax.f32 %v516, %v517
        %v519 = vrot.slane %v453, 4
        %v520 = vmax.f32 %v453, %v519
        %v521 = vrot.slane %v520, 2
        %v522 = vmax.f32 %v520, %v521
        %v523 = vrot.slane %v522, 1
        %v524 = vmax.f32 %v522, %v523
        %v525 = vrot.slane %v454, 4
        %v526 = vmax.f32 %v454, %v525
        %v527 = vrot.slane %v526, 2
        %v528 = vmax.f32 %v526, %v527
        %v529 = vrot.slane %v528, 1
        %v530 = vmax.f32 %v528, %v529
        %v531 = vrot.slane %v455, 4
        %v532 = vmax.f32 %v455, %v531
        %v533 = vrot.slane %v532, 2
        %v534 = vmax.f32 %v532, %v533
        %v535 = vrot.slane %v534, 1
        %v536 = vmax.f32 %v534, %v535
        %v537 = vrot.slane %v456, 4
        %v538 = vmax.f32 %v456, %v537
        %v539 = vrot.slane %v538, 2
        %v540 = vmax.f32 %v538, %v539
        %v541 = vrot.slane %v540, 1
        %v542 = vmax.f32 %v540, %v541
        %v543 = vrot.slane %v457, 4
        %v544 = vmax.f32 %v457, %v543
        %v545 = vrot.slane %v544, 2
        %v546 = vmax.f32 %v544, %v545
        %v547 = vrot.slane %v546, 1
        %v548 = vmax.f32 %v546, %v547
        %v549 = vrot.slane %v458, 4
        %v550 = vmax.f32 %v458, %v549
        %v551 = vrot.slane %v550, 2
        %v552 = vmax.f32 %v550, %v551
        %v553 = vrot.slane %v552, 1
        %v554 = vmax.f32 %v552, %v553
        %p555 = scmp.eq.s32.totalorder %s26, 0
        // Predicated region
        $region45: #{tpu_custom_call.1} parent=31 // pred_check
          %p556 = pneg %p555
        $region46: #{tpu_custom_call.1} parent=31 // pred_check_branch
          %558 = sbr.rel (%p556) target = $region48
        $region47: #{tpu_custom_call.1} parent=31 // pred_region
          %559 = vst [vmem:[%s231] sm:$0xff] -inf
          %560 = vst [vmem:[%s231 + $0x8] sm:$0xff] -inf
        $region48: #{tpu_custom_call.1} parent=31 // pred_fallthru
          _
        %v561 = vld [vmem:[%s231] sm:$0xff]
        %v562 = vld [vmem:[%s231 + $0x8] sm:$0xff]
        %vm579 = vcmask 1041409
        %v580 = vsel %vm579, %v476, %v464
        %vm581 = vcmask 1042434
        %v582 = vsel %vm581, %v488, %v580
        %vm583 = vcmask 1043459
        %v584 = vsel %vm583, %v500, %v582
        %vm585 = vcmask 1044484
        %v586 = vsel %vm585, %v512, %v584
        %vm587 = vcmask 1045509
        %v588 = vsel %vm587, %v524, %v586
        %vm589 = vcmask 1046534
        %v590 = vsel %vm589, %v536, %v588
        %vm591 = vcmask 1047559
        %v592 = vsel %vm591, %v548, %v590
        %v593 = vsel %vm579, %v482, %v470
        %v594 = vsel %vm581, %v494, %v593
        %v595 = vsel %vm583, %v506, %v594
        %v596 = vsel %vm585, %v518, %v595
        %v597 = vsel %vm587, %v530, %v596
        %v598 = vsel %vm589, %v542, %v597
        %v599 = vsel %vm591, %v554, %v598
        %v602 = vmax.f32 %v561, %v592
        %v603 = vmax.f32 %v562, %v599
        %604 = vst [vmem:[%s231] sm:$0xff] %v602
        %605 = vst [vmem:[%s231 + $0x8] sm:$0xff] %v603
        %p606 = scmp.eq.s32.totalorder %s26, 3
        // Predicated region
        $region49: #{tpu_custom_call.1} parent=31 // pred_check
          %p607 = pneg %p606
        $region50: #{tpu_custom_call.1} parent=31 // pred_check_branch
          %609 = sbr.rel (%p607) target = $region52
        $region51: #{tpu_custom_call.1} parent=31 // pred_region
          %v610 = vld [vmem:[%s231] sm:$0xff]
          %v611 = vld [vmem:[%s231 + $0x8] sm:$0xff]
          %v612 = vld [vmem:[#allocation7] sm:$0x3]
          %v614 = vlaneseq
          %v615 = vshrl.u32 %v614, 7
          %v616 = vsub.s32 0, %v615
          %v617 = vrot.slane %v612, %v616
          %v618 = vlaneseq
          %v619 = vshrl.u32 %v618, 7
          %v620 = vsub.s32 1, %v619
          %v621 = vrot.slane %v612, %v620
          %v624 = vadd.f32 %v610, %v617
          %v625 = vadd.f32 %v611, %v621
          %v626 = vmax.f32 %v624, 0.0
          %v627 = vmax.f32 %v625, 0.0
          %628 = vst [vmem:[%s231] sm:$0xff] %v626
          %629 = vst [vmem:[%s231 + $0x8] sm:$0xff] %v627
        $region52: #{tpu_custom_call.1} parent=31 // pred_fallthru
          _
        %s630 = sand.u32 %s111, 1
        %s631 = scalar_lea.sflag [#allocation4], %s630
        %s632 = sand.u32 %s111, 1
        %s633 = smul.addr %s632, 16
        %s634 = scalar_lea.vmem [#allocation8], %s633
        // Predicated region
        $region53: #{tpu_custom_call.1} parent=31 // pred_check
          %p635 = pneg %p121
        $region54: #{tpu_custom_call.1} parent=31 // pred_check_branch
          %637 = sbr.rel (%p635) target = $region56
        $region55: #{tpu_custom_call.1} parent=31 // pred_region
          %s639 = ssub.s32 256, 256
          %640 = vsyncadd %s631, %s639
          %s641 = smul.addr %s25, 2
          %s642 = smul.addr %s641, 128
          %s643 = scalar_lea.hbm %s3, %s642
          %s645 = sshll.u32 %s634, 4
          %s646 = int_to_ptr.vmem [resolvable:$true] %s645
          %648 = dma.vmem_to_hbm [thread:$0]  %s646, 256, %s643, %s631
        $region56: #{tpu_custom_call.1} parent=31 // pred_fallthru
          _
      $region32: #{tpu_custom_call.1} parent=5 // pred_fallthru
        _
      %p649 = scmp.le.s32.totalorder 2, %s16
      // Predicated region
      $region57: #{tpu_custom_call.1} parent=5 // pred_check
        %p650 = pneg %p649
      $region58: #{tpu_custom_call.1} parent=5 // pred_check_branch
        %652 = sbr.rel (%p650) target = $region60
      $region59: #{tpu_custom_call.1} parent=5 // pred_region
        %s653 = ssub.s32 %s16, 2
        // Predicated region
        $region61: #{tpu_custom_call.1} parent=59 // pred_check
          %p654 = pneg %p127
        $region62: #{tpu_custom_call.1} parent=59 // pred_check_branch
          %656 = sbr.rel (%p654) target = $region64
        $region63: #{tpu_custom_call.1} parent=59 // pred_region
          %s657 = sand.u32 %s112, 1
          %s658 = scalar_lea.sflag [#allocation4], %s657
          %s659 = sand.u32 %s112, 1
          %s660 = smul.addr %s659, 16
          %s661 = scalar_lea.vmem [#allocation8], %s660
          %662 = dma.done %s658, 256
        $region64: #{tpu_custom_call.1} parent=59 // pred_fallthru
          _
      $region60: #{tpu_custom_call.1} parent=5 // pred_fallthru
        _
    $region6: #{tpu_custom_call.1} parent=1 // loop_footer
      %s20 = sadd.s32 1, %s16
    $region7: #{tpu_custom_call.1} parent=1 // loop_footer_branch
      %15 = sbr.rel target = $region3
    $region8: #{tpu_custom_call.1} parent=1 // loop_exit
      _
    %663 = vsyncpa [#allocation3], 1
    %s664 = scalar_lea.sflag [#allocation3], 1
    %665 = vsyncpa %s664, 1
    %666 = vsyncpa [#allocation6], 1
    %667 = vsyncpa [#allocation4], 1
    %s668 = scalar_lea.sflag [#allocation4], 1
    %669 = vsyncpa %s668, 1

</llo_original>
